<compile_context>
chip_gen: v7x
topology: tpu7x:2x2x1
jax: 0.10.0
libtpu: 0.0.40
codegen_flags: <defaults>
</compile_context>

<pallas_src>
import jax
import jax.numpy as jnp
from jax.experimental import pallas as pl
from jax.experimental.pallas import tpu as pltpu


def _cdiv(a, b):
    return -(-a // b)


def _round_up(x, m):
    return ((x + m - 1) // m) * m


def mlp_kernel(x_ref, w1_ref, b1_ref, w2_ref, b2_ref, o_ref):
    # fc1: (TB, IN) @ (IN, HID) in full f32, + bias, ReLU
    h = jnp.dot(x_ref[...], w1_ref[...],
                preferred_element_type=jnp.float32,
                precision=jax.lax.Precision.HIGHEST)
    h = jnp.maximum(h + b1_ref[...], 0.0)
    # fc2: (TB, HID) @ (HID, OUT) in full f32, + bias
    out = jnp.dot(h, w2_ref[...],
                  preferred_element_type=jnp.float32,
                  precision=jax.lax.Precision.HIGHEST)
    o_ref[...] = (out + b2_ref[...]).astype(o_ref.dtype)


def hand_char_classifier(x, w1, b1, w2, b2):
    """x: (B, in) f32; w1: (in, hidden); b1: (1, hidden);
    w2: (hidden, num_classes); b2: (1, num_classes).
    Equivalent to torch: fc2(relu(fc1(x)))."""
    B, in_features = x.shape
    hidden = w1.shape[1]
    num_classes = w2.shape[1]

    MAX_TILE = 1024          # ~0.25 MiB x-tile + ~0.12 MiB out-tile: tiny VMEM
    SPLIT_THRESHOLD = 512    # only split small batches if both halves are real work

    n_tiles = _cdiv(B, MAX_TILE)
    if n_tiles == 1 and B >= SPLIT_THRESHOLD:
        n_tiles = 2          # give v7x's second TensorCore something to do

    if n_tiles == 1:
        # Single tile exactly covering the batch: full-extent block is legal
        # for any B, so no padding and no post-slice at all.
        tile_b = B
        b_pad = B
        x_p = x
    else:
        tile_b = _round_up(_cdiv(B, n_tiles), 8)
        b_pad = n_tiles * tile_b
        x_p = x if b_pad == B else jnp.pad(x, ((0, b_pad - B), (0, 0)))

    out = pl.pallas_call(
        mlp_kernel,
        out_shape=jax.ShapeDtypeStruct((b_pad, num_classes), jnp.float32),
        grid=(n_tiles,),
        in_specs=[
            # streamed batch tiles of x (no feature padding, no cast)
            pl.BlockSpec((tile_b, in_features), lambda i: (i, 0)),
            # weights / biases: full-array blocks, constant index_map ->
            # VMEM-resident across all grid steps
            pl.BlockSpec((in_features, hidden), lambda i: (0, 0)),
            pl.BlockSpec((1, hidden), lambda i: (0, 0)),
            pl.BlockSpec((hidden, num_classes), lambda i: (0, 0)),
            pl.BlockSpec((1, num_classes), lambda i: (0, 0)),
        ],
        out_specs=pl.BlockSpec((tile_b, num_classes), lambda i: (i, 0)),
        compiler_params=pltpu.CompilerParams(
            dimension_semantics=("parallel",)),
    )(x_p, w1, b1, w2, b2)

    return out if b_pad == B else out[:B]


def init_params(key, input_size=63, hidden_size=128, num_classes=31):
    # Deterministic init mimicking torch.nn.Linear (uniform(-1/sqrt(fan_in), ...)).
    k1, k2, k3, k4 = jax.random.split(key, 4)
    bound1 = 1.0 / (input_size ** 0.5)
    bound2 = 1.0 / (hidden_size ** 0.5)
    w1 = jax.random.uniform(k1, (input_size, hidden_size), jnp.float32, -bound1, bound1)
    b1 = jax.random.uniform(k2, (1, hidden_size), jnp.float32, -bound1, bound1)
    w2 = jax.random.uniform(k3, (hidden_size, num_classes), jnp.float32, -bound2, bound2)
    b2 = jax.random.uniform(k4, (1, num_classes), jnp.float32, -bound2, bound2)
    return w1, b1, w2, b2


def _reference(x, w1, b1, w2, b2):
    h = jnp.dot(x, w1, precision=jax.lax.Precision.HIGHEST) + b1
    h = jnp.maximum(h, 0.0)
    return jnp.dot(h, w2, precision=jax.lax.Precision.HIGHEST) + b2


if __name__ == "__main__":
    key = jax.random.PRNGKey(0)
    kx, kx2, kp = jax.random.split(key, 3)

    input_size, hidden_size, num_classes = 63, 128, 31
    w1, b1, w2, b2 = init_params(kp, input_size, hidden_size, num_classes)

    # Small batch: single exact-size tile, no padding, no slicing.
    B = 4
    x = jax.random.normal(kx, (B, input_size), jnp.float32)
    out = hand_char_classifier(x, w1, b1, w2, b2)
    jax.block_until_ready(out)
    assert out.shape == (B, num_classes)
    ref = _reference(x, w1, b1, w2, b2)
    assert jnp.allclose(out, ref, atol=1e-4, rtol=1e-4)

    # Larger batch: exercises the multi-tile / batch-padded path (grid >= 2).
    B2 = 520
    x2 = jax.random.normal(kx2, (B2, input_size), jnp.float32)
    out2 = hand_char_classifier(x2, w1, b1, w2, b2)
    jax.block_until_ready(out2)
    assert out2.shape == (B2, num_classes)
    ref2 = _reference(x2, w1, b1, w2, b2)
    assert jnp.allclose(out2, ref2, atol=1e-4, rtol=1e-4)

    print("KERNEL_OK")
</pallas_src>

<mosaic_0001>
module attributes {stable_mosaic.version = 11 : i64} {
  func.func @mlp_kernel(%arg0: i32, %arg1: memref<4x63xf32, #tpu.memory_space<vmem>>, %arg2: memref<63x128xf32, #tpu.memory_space<vmem>>, %arg3: memref<1x128xf32, #tpu.memory_space<vmem>>, %arg4: memref<128x31xf32, #tpu.memory_space<vmem>>, %arg5: memref<1x31xf32, #tpu.memory_space<vmem>>, %arg6: memref<4x31xf32, #tpu.memory_space<vmem>>) attributes {dimension_semantics = [#tpu.dimension_semantics<parallel>], iteration_bounds = array<i64: 1>, scalar_prefetch = 0 : i64, scratch_operands = 0 : i64, tpu.core_type = #tpu.core_type<tc>, window_params = [{transform_indices = @transform_0, window_bounds = array<i64: 4, 63>}, {pipeline_mode = #tpu.pipeline_mode<synchronous>, transform_indices = @transform_1, window_bounds = array<i64: 63, 128>}, {pipeline_mode = #tpu.pipeline_mode<synchronous>, transform_indices = @transform_2, window_bounds = array<i64: 1, 128>}, {pipeline_mode = #tpu.pipeline_mode<synchronous>, transform_indices = @transform_3, window_bounds = array<i64: 128, 31>}, {pipeline_mode = #tpu.pipeline_mode<synchronous>, transform_indices = @transform_4, window_bounds = array<i64: 1, 31>}, {transform_indices = @transform_5, window_bounds = array<i64: 4, 31>}]} {
    %c0 = arith.constant 0 : index
    %c0_0 = arith.constant 0 : index
    %0 = vector.load %arg1[%c0, %c0_0] : memref<4x63xf32, #tpu.memory_space<vmem>>, vector<4x63xf32>
    %c0_1 = arith.constant 0 : index
    %c0_2 = arith.constant 0 : index
    %1 = vector.load %arg2[%c0_1, %c0_2] : memref<63x128xf32, #tpu.memory_space<vmem>>, vector<63x128xf32>
    %cst = arith.constant dense<0.000000e+00> : vector<4x128xf32>
    %2 = tpu.matmul %0, %1, %cst {dimension_numbers = #tpu.dot_dimension_numbers<[1], [0], [0], [1], [0, 0, 1, 1], [], []>, precision = #tpu.contract_precision<fp32>} : vector<4x63xf32>, vector<63x128xf32>, vector<4x128xf32> -> vector<4x128xf32>
    %c0_3 = arith.constant 0 : index
    %c0_4 = arith.constant 0 : index
    %3 = vector.load %arg3[%c0_3, %c0_4] : memref<1x128xf32, #tpu.memory_space<vmem>>, vector<1x128xf32>
    %4 = vector.broadcast %3 : vector<1x128xf32> to vector<4x128xf32>
    %5 = arith.addf %2, %4 : vector<4x128xf32>
    %cst_5 = arith.constant 0.000000e+00 : f32
    %6 = vector.broadcast %cst_5 : f32 to vector<4x128xf32>
    %7 = arith.maximumf %5, %6 : vector<4x128xf32>
    %c0_6 = arith.constant 0 : index
    %c0_7 = arith.constant 0 : index
    %8 = vector.load %arg4[%c0_6, %c0_7] : memref<128x31xf32, #tpu.memory_space<vmem>>, vector<128x31xf32>
    %cst_8 = arith.constant dense<0.000000e+00> : vector<4x31xf32>
    %9 = tpu.matmul %7, %8, %cst_8 {dimension_numbers = #tpu.dot_dimension_numbers<[1], [0], [0], [1], [0, 0, 1, 1], [], []>, precision = #tpu.contract_precision<fp32>} : vector<4x128xf32>, vector<128x31xf32>, vector<4x31xf32> -> vector<4x31xf32>
    %c0_9 = arith.constant 0 : index
    %c0_10 = arith.constant 0 : index
    %10 = vector.load %arg5[%c0_9, %c0_10] : memref<1x31xf32, #tpu.memory_space<vmem>>, vector<1x31xf32>
    %11 = vector.broadcast %10 : vector<1x31xf32> to vector<4x31xf32>
    %12 = arith.addf %9, %11 : vector<4x31xf32>
    %c0_11 = arith.constant 0 : index
    %c0_12 = arith.constant 0 : index
    %13 = vector.load %arg6[%c0_11, %c0_12] : memref<4x31xf32, #tpu.memory_space<vmem>>, vector<4x31xf32>
    tpu.vector_store %arg6[%c0_11, %c0_12], %12 {strides = array<i32>} : memref<4x31xf32, #tpu.memory_space<vmem>>, vector<4x31xf32>,
    return
  }
  func.func @transform_0(%arg0: i32) -> (i32, i32) {
    %c0_i32 = arith.constant 0 : i32
    %c0_i32_0 = arith.constant 0 : i32
    return %arg0, %c0_i32 : i32, i32
  }
  func.func @transform_1(%arg0: i32) -> (i32, i32) {
    %c0_i32 = arith.constant 0 : i32
    %c0_i32_0 = arith.constant 0 : i32
    %c0_i32_1 = arith.constant 0 : i32
    return %c0_i32, %c0_i32_0 : i32, i32
  }
  func.func @transform_2(%arg0: i32) -> (i32, i32) {
    %c0_i32 = arith.constant 0 : i32
    %c0_i32_0 = arith.constant 0 : i32
    %c0_i32_1 = arith.constant 0 : i32
    return %c0_i32, %c0_i32_0 : i32, i32
  }
  func.func @transform_3(%arg0: i32) -> (i32, i32) {
    %c0_i32 = arith.constant 0 : i32
    %c0_i32_0 = arith.constant 0 : i32
    %c0_i32_1 = arith.constant 0 : i32
    return %c0_i32, %c0_i32_0 : i32, i32
  }
  func.func @transform_4(%arg0: i32) -> (i32, i32) {
    %c0_i32 = arith.constant 0 : i32
    %c0_i32_0 = arith.constant 0 : i32
    %c0_i32_1 = arith.constant 0 : i32
    return %c0_i32, %c0_i32_0 : i32, i32
  }
  func.func @transform_5(%arg0: i32) -> (i32, i32) {
    %c0_i32 = arith.constant 0 : i32
    %c0_i32_0 = arith.constant 0 : i32
    return %arg0, %c0_i32 : i32, i32
  }
}

</mosaic_0001>

<llo_original>
// kernel: tpu_custom_call.1
$region0: #{tpu_custom_call.1}
  #allocation0 [shape = 'u32[]', space=smem, size = 0x4, offset = 0x4, fixed_abs, tag = 'smem constant byte address 0x4 - core index']
  #allocation1 [shape = 'u32[144,128]{1,0:T(1,128)}', space=vmem, size = 0x12000, scoped, tag = 'internal scratch']
  %s0 = inlined_call_operand.vmem [shape: f32[4,63], index: 0, kind: input, shape index: {}]
  %s1 = inlined_call_operand.vmem [shape: f32[63,128], index: 1, kind: input, shape index: {}]
  %s2 = inlined_call_operand.vmem [shape: f32[1,128], index: 2, kind: input, shape index: {}]
  %s3 = inlined_call_operand.vmem [shape: f32[128,31], index: 3, kind: input, shape index: {}]
  %s4 = inlined_call_operand.vmem [shape: f32[1,31], index: 4, kind: input, shape index: {}]
  %s5 = inlined_call_operand.hbm [shape: f32[4,31], index: 5, kind: output, shape index: {}]
  %s6 = sld [smem:[#allocation0]]
  $region30: #{tpu_custom_call.1} parent=0
    _
  %s8 = ssub.s32 1, %s6
  %s9 = scalar_select 0, %s8, %s6
  $region1: #{tpu_custom_call.1} parent=0
    #allocation2 [shape = 'u8[2048]{0}', space=vmem, size = 0x800, scoped, tag = 'output window, operand 0, single buffered']
    #allocation3 [shape = 's32[1]{0}', space=sflag, size = 0x4, scoped, tag = 'scoped memory for tpu_custom_call.1']
    %10 = vsyncpa [#allocation3], 0
    // Predicated region
    $region2: #{tpu_custom_call.1} parent=1 // pred_check
      _
    $region3: #{tpu_custom_call.1} parent=1 // pred_check_branch
      %12 = sbr.rel (0) target = $region5
    $region4: #{tpu_custom_call.1} parent=1 // pred_region
      _
    $region5: #{tpu_custom_call.1} parent=1 // pred_fallthru
      _
    // Predicated region
    $region6: #{tpu_custom_call.1} parent=1 // pred_check
      _
    $region7: #{tpu_custom_call.1} parent=1 // pred_check_branch
      %14 = sbr.rel (0) target = $region9
    $region8: #{tpu_custom_call.1} parent=1 // pred_region
      _
    $region9: #{tpu_custom_call.1} parent=1 // pred_fallthru
      _
    // Predicated region
    $region10: #{tpu_custom_call.1} parent=1 // pred_check
      _
    $region11: #{tpu_custom_call.1} parent=1 // pred_check_branch
      %16 = sbr.rel (0) target = $region13
    $region12: #{tpu_custom_call.1} parent=1 // pred_region
      _
    $region13: #{tpu_custom_call.1} parent=1 // pred_fallthru
      _
    // Predicated region
    $region14: #{tpu_custom_call.1} parent=1 // pred_check
      _
    $region15: #{tpu_custom_call.1} parent=1 // pred_check_branch
      %18 = sbr.rel (0) target = $region17
    $region16: #{tpu_custom_call.1} parent=1 // pred_region
      _
    $region17: #{tpu_custom_call.1} parent=1 // pred_fallthru
      _
    // Predicated region
    $region18: #{tpu_custom_call.1} parent=1 // pred_check
      _
    $region19: #{tpu_custom_call.1} parent=1 // pred_check_branch
      %20 = sbr.rel (0) target = $region21
    $region20: #{tpu_custom_call.1} parent=1 // pred_region
      _
    $region21: #{tpu_custom_call.1} parent=1 // pred_fallthru
      _
    %v21 = vld [vmem:[%s0] sm:$0xf]
    %v22 = vld [vmem:[%s1] sm:$0xff]
    %v23 = vld [vmem:[%s1 + $0x8] sm:$0xff]
    %v24 = vld [vmem:[%s1 + $0x10] sm:$0xff]
    %v25 = vld [vmem:[%s1 + $0x18] sm:$0xff]
    %v26 = vld [vmem:[%s1 + $0x20] sm:$0xff]
    %v27 = vld [vmem:[%s1 + $0x28] sm:$0xff]
    %v28 = vld [vmem:[%s1 + $0x30] sm:$0xff]
    %v29 = vld [vmem:[%s1 + $0x38] sm:$0x7f]
    %v30 = vld [vmem:[%s2] sm:$0x1]
    %v32 = vlaneseq
    %v33 = vshrl.u32 %v32, 7
    %v34 = vsub.s32 0, %v33
    %v35 = vrot.slane %v30, %v34
    %vm37 = vcmask 515072
    %v39 = vsel %vm37, %v21, 0
    %vm41 = vcmask 1046528
    %v43 = vsel %vm41, %v29, 0
    %45 = vmatprep.subr.mxu0 0.0
    %v46 = vand.u32 %v22, 4294901760
    %47 = vmatpush1.msra.mxu0 %v46
    %48 = vmatprep.subr.mxu0 0.0
    %v49 = vand.u32 %v23, 4294901760
    %50 = vmatpush1.msra.mxu0 %v49
    %51 = vmatprep.subr.mxu0 0.0
    %v52 = vand.u32 %v24, 4294901760
    %53 = vmatpush1.msra.mxu0 %v52
    %54 = vmatprep.subr.mxu0 0.0
    %v55 = vand.u32 %v25, 4294901760
    %56 = vmatpush1.msra.mxu0 %v55
    %57 = vmatprep.subr.mxu0 0.0
    %v58 = vand.u32 %v26, 4294901760
    %59 = vmatpush1.msra.mxu0 %v58
    %60 = vmatprep.subr.mxu0 0.0
    %v61 = vand.u32 %v27, 4294901760
    %62 = vmatpush1.msra.mxu0 %v61
    %63 = vmatprep.subr.mxu0 0.0
    %v64 = vand.u32 %v28, 4294901760
    %65 = vmatpush1.msra.mxu0 %v64
    %66 = vmatprep.subr.mxu0 0.0
    %v67 = vand.u32 %v43, 4294901760
    %68 = vmatpush1.msra.mxu0 %v67
    %69 = vmatprep.subr.mxu0 0.0
    %70 = vmatpush1.msra.mxu0 0.0
    %71 = vmatprep.subr.mxu0 0.0
    %72 = vmatpush1.msra.mxu0 0.0
    %73 = vmatprep.subr.mxu0 0.0
    %74 = vmatpush1.msra.mxu0 0.0
    %75 = vmatprep.subr.mxu0 0.0
    %76 = vmatpush1.msra.mxu0 0.0
    %77 = vmatprep.subr.mxu0 0.0
    %78 = vmatpush1.msra.mxu0 0.0
    %79 = vmatprep.subr.mxu0 0.0
    %80 = vmatpush1.msra.mxu0 0.0
    %81 = vmatprep.subr.mxu0 0.0
    %82 = vmatpush1.msra.mxu0 0.0
    %83 = vmatprep.subr.mxu0 0.0
    %84 = vmatpush1.msra.mxu0 0.0
    %85 = vmatprep.subr.mxu0 0.0
    %86 = vmatpush1.msra.mxu0 0.0
    %87 = vmatprep.subr.mxu0 0.0
    %88 = vmatpush1.msra.mxu0 0.0
    %89 = vmatprep.subr.mxu0 0.0
    %90 = vmatpush1.msra.mxu0 0.0
    %91 = vmatprep.subr.mxu0 0.0
    %92 = vmatpush1.msra.mxu0 0.0
    %93 = vmatprep.subr.mxu0 0.0
    %94 = vmatpush1.msra.mxu0 0.0
    %95 = vmatprep.subr.mxu0 0.0
    %96 = vmatpush1.msra.mxu0 0.0
    %97 = vmatprep.subr.mxu0 0.0
    %98 = vmatpush1.msra.mxu0 0.0
    %99 = vmatprep.subr.mxu0 0.0
    %100 = vmatpush1.msra.mxu0 0.0
    %101 = vmatprep.subr.mxu0 0.0
    %102 = vmatpush1.msra.mxu0 0.0
    %103 = vmatprep.subr.mxu0 0.0
    %104 = vmatpush1.msra.mxu0 0.0
    %105 = vmatprep.subr.mxu0 0.0
    %106 = vmatpush1.msra.mxu0 0.0
    %107 = vmatprep.subr.mxu0 0.0
    %108 = vmatpush1.msra.mxu0 0.0
    %109 = vmatprep.subr.mxu0 0.0
    %110 = vmatpush1.msra.mxu0 0.0
    %111 = vmatprep.subr.mxu0 0.0
    %112 = vmatpush1.msra.mxu0 0.0
    %113 = vmatprep.subr.mxu0 0.0
    %114 = vmatpush1.msra.mxu0 0.0
    %115 = vmatprep.subr.mxu0 0.0
    %116 = vmatpush1.msra.mxu0 0.0
    %117 = vmatprep.mubr.f32.mxu0 0.0
    %v118 = vand.u32 %v39, 4294901760
    %v119 = vsub.f32 %v39, %v118
    %v120 = vand.u32 %v119, 4294901760
    %v121 = vsub.f32 %v119, %v120
    %v122 = vand.u32 %v121, 4294901760
    %123 = vmatmul.mubr.f32.gmra.mrb[0].mxu0 %v122
    %v124 = vpop.f32.mrb[0].mxu0
    %v125 = vadd.f32 %v35, %v124
    %v126 = vpop.f32.mrb[0].mxu0
    %127 = vdwg.mxu0
    %128 = vmatprep.subr.mxu0 0.0
    %v129 = vand.u32 %v22, 4294901760
    %v130 = vsub.f32 %v22, %v129
    %v131 = vand.u32 %v130, 4294901760
    %v132 = vsub.f32 %v130, %v131
    %v133 = vand.u32 %v132, 4294901760
    %134 = vmatpush1.msra.mxu0 %v133
    %135 = vmatprep.subr.mxu0 0.0
    %v136 = vand.u32 %v23, 4294901760
    %v137 = vsub.f32 %v23, %v136
    %v138 = vand.u32 %v137, 4294901760
    %v139 = vsub.f32 %v137, %v138
    %v140 = vand.u32 %v139, 4294901760
    %141 = vmatpush1.msra.mxu0 %v140
    %142 = vmatprep.subr.mxu0 0.0
    %v143 = vand.u32 %v24, 4294901760
    %v144 = vsub.f32 %v24, %v143
    %v145 = vand.u32 %v144, 4294901760
    %v146 = vsub.f32 %v144, %v145
    %v147 = vand.u32 %v146, 4294901760
    %148 = vmatpush1.msra.mxu0 %v147
    %149 = vmatprep.subr.mxu0 0.0
    %v150 = vand.u32 %v25, 4294901760
    %v151 = vsub.f32 %v25, %v150
    %v152 = vand.u32 %v151, 4294901760
    %v153 = vsub.f32 %v151, %v152
    %v154 = vand.u32 %v153, 4294901760
    %155 = vmatpush1.msra.mxu0 %v154
    %156 = vmatprep.subr.mxu0 0.0
    %v157 = vand.u32 %v26, 4294901760
    %v158 = vsub.f32 %v26, %v157
    %v159 = vand.u32 %v158, 4294901760
    %v160 = vsub.f32 %v158, %v159
    %v161 = vand.u32 %v160, 4294901760
    %162 = vmatpush1.msra.mxu0 %v161
    %163 = vmatprep.subr.mxu0 0.0
    %v164 = vand.u32 %v27, 4294901760
    %v165 = vsub.f32 %v27, %v164
    %v166 = vand.u32 %v165, 4294901760
    %v167 = vsub.f32 %v165, %v166
    %v168 = vand.u32 %v167, 4294901760
    %169 = vmatpush1.msra.mxu0 %v168
    %170 = vmatprep.subr.mxu0 0.0
    %v171 = vand.u32 %v28, 4294901760
    %v172 = vsub.f32 %v28, %v171
    %v173 = vand.u32 %v172, 4294901760
    %v174 = vsub.f32 %v172, %v173
    %v175 = vand.u32 %v174, 4294901760
    %176 = vmatpush1.msra.mxu0 %v175
    %177 = vmatprep.subr.mxu0 0.0
    %v178 = vand.u32 %v43, 4294901760
    %v179 = vsub.f32 %v43, %v178
    %v180 = vand.u32 %v179, 4294901760
    %v181 = vsub.f32 %v179, %v180
    %v182 = vand.u32 %v181, 4294901760
    %183 = vmatpush1.msra.mxu0 %v182
    %184 = vmatprep.subr.mxu0 0.0
    %185 = vmatpush1.msra.mxu0 0.0
    %186 = vmatprep.subr.mxu0 0.0
    %187 = vmatpush1.msra.mxu0 0.0
    %188 = vmatprep.subr.mxu0 0.0
    %189 = vmatpush1.msra.mxu0 0.0
    %190 = vmatprep.subr.mxu0 0.0
    %191 = vmatpush1.msra.mxu0 0.0
    %192 = vmatprep.subr.mxu0 0.0
    %193 = vmatpush1.msra.mxu0 0.0
    %194 = vmatprep.subr.mxu0 0.0
    %195 = vmatpush1.msra.mxu0 0.0
    %196 = vmatprep.subr.mxu0 0.0
    %197 = vmatpush1.msra.mxu0 0.0
    %198 = vmatprep.subr.mxu0 0.0
    %199 = vmatpush1.msra.mxu0 0.0
    %200 = vmatprep.subr.mxu0 0.0
    %201 = vmatpush1.msra.mxu0 0.0
    %202 = vmatprep.subr.mxu0 0.0
    %203 = vmatpush1.msra.mxu0 0.0
    %204 = vmatprep.subr.mxu0 0.0
    %205 = vmatpush1.msra.mxu0 0.0
    %206 = vmatprep.subr.mxu0 0.0
    %207 = vmatpush1.msra.mxu0 0.0
    %208 = vmatprep.subr.mxu0 0.0
    %209 = vmatpush1.msra.mxu0 0.0
    %210 = vmatprep.subr.mxu0 0.0
    %211 = vmatpush1.msra.mxu0 0.0
    %212 = vmatprep.subr.mxu0 0.0
    %213 = vmatpush1.msra.mxu0 0.0
    %214 = vmatprep.subr.mxu0 0.0
    %215 = vmatpush1.msra.mxu0 0.0
    %216 = vmatprep.subr.mxu0 0.0
    %217 = vmatpush1.msra.mxu0 0.0
    %218 = vmatprep.subr.mxu0 0.0
    %219 = vmatpush1.msra.mxu0 0.0
    %220 = vmatprep.subr.mxu0 0.0
    %221 = vmatpush1.msra.mxu0 0.0
    %222 = vmatprep.subr.mxu0 0.0
    %223 = vmatpush1.msra.mxu0 0.0
    %224 = vmatprep.subr.mxu0 0.0
    %225 = vmatpush1.msra.mxu0 0.0
    %226 = vmatprep.subr.mxu0 0.0
    %227 = vmatpush1.msra.mxu0 0.0
    %228 = vmatprep.subr.mxu0 0.0
    %229 = vmatpush1.msra.mxu0 0.0
    %230 = vmatprep.subr.mxu0 0.0
    %231 = vmatpush1.msra.mxu0 0.0
    %232 = vmatprep.mubr.f32.mxu0 0.0
    %v233 = vand.u32 %v39, 4294901760
    %234 = vmatmul.mubr.f32.gmra.mrb[0].mxu0 %v233
    %v235 = vpop.f32.mrb[0].mxu0
    %v236 = vadd.f32 %v125, %v235
    %v237 = vpop.f32.mrb[0].mxu0
    %238 = vdwg.mxu0
    %239 = vmatprep.subr.mxu0 0.0
    %v240 = vand.u32 %v22, 4294901760
    %v241 = vsub.f32 %v22, %v240
    %242 = vmatpush1.msra.mxu0 %v241
    %243 = vmatprep.subr.mxu0 0.0
    %v244 = vand.u32 %v23, 4294901760
    %v245 = vsub.f32 %v23, %v244
    %246 = vmatpush1.msra.mxu0 %v245
    %247 = vmatprep.subr.mxu0 0.0
    %v248 = vand.u32 %v24, 4294901760
    %v249 = vsub.f32 %v24, %v248
    %250 = vmatpush1.msra.mxu0 %v249
    %251 = vmatprep.subr.mxu0 0.0
    %v252 = vand.u32 %v25, 4294901760
    %v253 = vsub.f32 %v25, %v252
    %254 = vmatpush1.msra.mxu0 %v253
    %255 = vmatprep.subr.mxu0 0.0
    %v256 = vand.u32 %v26, 4294901760
    %v257 = vsub.f32 %v26, %v256
    %258 = vmatpush1.msra.mxu0 %v257
    %259 = vmatprep.subr.mxu0 0.0
    %v260 = vand.u32 %v27, 4294901760
    %v261 = vsub.f32 %v27, %v260
    %262 = vmatpush1.msra.mxu0 %v261
    %263 = vmatprep.subr.mxu0 0.0
    %v264 = vand.u32 %v28, 4294901760
    %v265 = vsub.f32 %v28, %v264
    %266 = vmatpush1.msra.mxu0 %v265
    %267 = vmatprep.subr.mxu0 0.0
    %v268 = vand.u32 %v43, 4294901760
    %v269 = vsub.f32 %v43, %v268
    %270 = vmatpush1.msra.mxu0 %v269
    %271 = vmatprep.subr.mxu0 0.0
    %272 = vmatpush1.msra.mxu0 0.0
    %273 = vmatprep.subr.mxu0 0.0
    %274 = vmatpush1.msra.mxu0 0.0
    %275 = vmatprep.subr.mxu0 0.0
    %276 = vmatpush1.msra.mxu0 0.0
    %277 = vmatprep.subr.mxu0 0.0
    %278 = vmatpush1.msra.mxu0 0.0
    %279 = vmatprep.subr.mxu0 0.0
    %280 = vmatpush1.msra.mxu0 0.0
    %281 = vmatprep.subr.mxu0 0.0
    %282 = vmatpush1.msra.mxu0 0.0
    %283 = vmatprep.subr.mxu0 0.0
    %284 = vmatpush1.msra.mxu0 0.0
    %285 = vmatprep.subr.mxu0 0.0
    %286 = vmatpush1.msra.mxu0 0.0
    %287 = vmatprep.subr.mxu0 0.0
    %288 = vmatpush1.msra.mxu0 0.0
    %289 = vmatprep.subr.mxu0 0.0
    %290 = vmatpush1.msra.mxu0 0.0
    %291 = vmatprep.subr.mxu0 0.0
    %292 = vmatpush1.msra.mxu0 0.0
    %293 = vmatprep.subr.mxu0 0.0
    %294 = vmatpush1.msra.mxu0 0.0
    %295 = vmatprep.subr.mxu0 0.0
    %296 = vmatpush1.msra.mxu0 0.0
    %297 = vmatprep.subr.mxu0 0.0
    %298 = vmatpush1.msra.mxu0 0.0
    %299 = vmatprep.subr.mxu0 0.0
    %300 = vmatpush1.msra.mxu0 0.0
    %301 = vmatprep.subr.mxu0 0.0
    %302 = vmatpush1.msra.mxu0 0.0
    %303 = vmatprep.subr.mxu0 0.0
    %304 = vmatpush1.msra.mxu0 0.0
    %305 = vmatprep.subr.mxu0 0.0
    %306 = vmatpush1.msra.mxu0 0.0
    %307 = vmatprep.subr.mxu0 0.0
    %308 = vmatpush1.msra.mxu0 0.0
    %309 = vmatprep.subr.mxu0 0.0
    %310 = vmatpush1.msra.mxu0 0.0
    %311 = vmatprep.subr.mxu0 0.0
    %312 = vmatpush1.msra.mxu0 0.0
    %313 = vmatprep.subr.mxu0 0.0
    %314 = vmatpush1.msra.mxu0 0.0
    %315 = vmatprep.subr.mxu0 0.0
    %316 = vmatpush1.msra.mxu0 0.0
    %317 = vmatprep.subr.mxu0 0.0
    %318 = vmatpush1.msra.mxu0 0.0
    %319 = vmatprep.mubr.f32.mxu0 0.0
    %v320 = vand.u32 %v39, 4294901760
    %v321 = vsub.f32 %v39, %v320
    %322 = vmatmul.mubr.f32.gmra.mrb[0].mxu0 %v321
    %v323 = vpop.f32.mrb[0].mxu0
    %v324 = vadd.f32 %v236, %v323
    %v325 = vpop.f32.mrb[0].mxu0
    %326 = vdwg.mxu0
    %327 = vmatprep.subr.mxu0 0.0
    %v328 = vand.u32 %v22, 4294901760
    %329 = vmatpush1.msra.mxu0 %v328
    %330 = vmatprep.subr.mxu0 0.0
    %v331 = vand.u32 %v23, 4294901760
    %332 = vmatpush1.msra.mxu0 %v331
    %333 = vmatprep.subr.mxu0 0.0
    %v334 = vand.u32 %v24, 4294901760
    %335 = vmatpush1.msra.mxu0 %v334
    %336 = vmatprep.subr.mxu0 0.0
    %v337 = vand.u32 %v25, 4294901760
    %338 = vmatpush1.msra.mxu0 %v337
    %339 = vmatprep.subr.mxu0 0.0
    %v340 = vand.u32 %v26, 4294901760
    %341 = vmatpush1.msra.mxu0 %v340
    %342 = vmatprep.subr.mxu0 0.0
    %v343 = vand.u32 %v27, 4294901760
    %344 = vmatpush1.msra.mxu0 %v343
    %345 = vmatprep.subr.mxu0 0.0
    %v346 = vand.u32 %v28, 4294901760
    %347 = vmatpush1.msra.mxu0 %v346
    %348 = vmatprep.subr.mxu0 0.0
    %v349 = vand.u32 %v43, 4294901760
    %350 = vmatpush1.msra.mxu0 %v349
    %351 = vmatprep.subr.mxu0 0.0
    %352 = vmatpush1.msra.mxu0 0.0
    %353 = vmatprep.subr.mxu0 0.0
    %354 = vmatpush1.msra.mxu0 0.0
    %355 = vmatprep.subr.mxu0 0.0
    %356 = vmatpush1.msra.mxu0 0.0
    %357 = vmatprep.subr.mxu0 0.0
    %358 = vmatpush1.msra.mxu0 0.0
    %359 = vmatprep.subr.mxu0 0.0
    %360 = vmatpush1.msra.mxu0 0.0
    %361 = vmatprep.subr.mxu0 0.0
    %362 = vmatpush1.msra.mxu0 0.0
    %363 = vmatprep.subr.mxu0 0.0
    %364 = vmatpush1.msra.mxu0 0.0
    %365 = vmatprep.subr.mxu0 0.0
    %366 = vmatpush1.msra.mxu0 0.0
    %367 = vmatprep.subr.mxu0 0.0
    %368 = vmatpush1.msra.mxu0 0.0
    %369 = vmatprep.subr.mxu0 0.0
    %370 = vmatpush1.msra.mxu0 0.0
    %371 = vmatprep.subr.mxu0 0.0
    %372 = vmatpush1.msra.mxu0 0.0
    %373 = vmatprep.subr.mxu0 0.0
    %374 = vmatpush1.msra.mxu0 0.0
    %375 = vmatprep.subr.mxu0 0.0
    %376 = vmatpush1.msra.mxu0 0.0
    %377 = vmatprep.subr.mxu0 0.0
    %378 = vmatpush1.msra.mxu0 0.0
    %379 = vmatprep.subr.mxu0 0.0
    %380 = vmatpush1.msra.mxu0 0.0
    %381 = vmatprep.subr.mxu0 0.0
    %382 = vmatpush1.msra.mxu0 0.0
    %383 = vmatprep.subr.mxu0 0.0
    %384 = vmatpush1.msra.mxu0 0.0
    %385 = vmatprep.subr.mxu0 0.0
    %386 = vmatpush1.msra.mxu0 0.0
    %387 = vmatprep.subr.mxu0 0.0
    %388 = vmatpush1.msra.mxu0 0.0
    %389 = vmatprep.subr.mxu0 0.0
    %390 = vmatpush1.msra.mxu0 0.0
    %391 = vmatprep.subr.mxu0 0.0
    %392 = vmatpush1.msra.mxu0 0.0
    %393 = vmatprep.subr.mxu0 0.0
    %394 = vmatpush1.msra.mxu0 0.0
    %395 = vmatprep.subr.mxu0 0.0
    %396 = vmatpush1.msra.mxu0 0.0
    %397 = vmatprep.subr.mxu0 0.0
    %398 = vmatpush1.msra.mxu0 0.0
    %399 = vmatprep.mubr.f32.mxu0 0.0
    %v400 = vand.u32 %v39, 4294901760
    %v401 = vsub.f32 %v39, %v400
    %v402 = vand.u32 %v401, 4294901760
    %403 = vmatmul.mubr.f32.gmra.mrb[0].mxu0 %v402
    %v404 = vpop.f32.mrb[0].mxu0
    %v405 = vadd.f32 %v324, %v404
    %v406 = vpop.f32.mrb[0].mxu0
    %407 = vdwg.mxu0
    %408 = vmatprep.subr.mxu0 0.0
    %v409 = vand.u32 %v22, 4294901760
    %v410 = vsub.f32 %v22, %v409
    %v411 = vand.u32 %v410, 4294901760
    %412 = vmatpush1.msra.mxu0 %v411
    %413 = vmatprep.subr.mxu0 0.0
    %v414 = vand.u32 %v23, 4294901760
    %v415 = vsub.f32 %v23, %v414
    %v416 = vand.u32 %v415, 4294901760
    %417 = vmatpush1.msra.mxu0 %v416
    %418 = vmatprep.subr.mxu0 0.0
    %v419 = vand.u32 %v24, 4294901760
    %v420 = vsub.f32 %v24, %v419
    %v421 = vand.u32 %v420, 4294901760
    %422 = vmatpush1.msra.mxu0 %v421
    %423 = vmatprep.subr.mxu0 0.0
    %v424 = vand.u32 %v25, 4294901760
    %v425 = vsub.f32 %v25, %v424
    %v426 = vand.u32 %v425, 4294901760
    %427 = vmatpush1.msra.mxu0 %v426
    %428 = vmatprep.subr.mxu0 0.0
    %v429 = vand.u32 %v26, 4294901760
    %v430 = vsub.f32 %v26, %v429
    %v431 = vand.u32 %v430, 4294901760
    %432 = vmatpush1.msra.mxu0 %v431
    %433 = vmatprep.subr.mxu0 0.0
    %v434 = vand.u32 %v27, 4294901760
    %v435 = vsub.f32 %v27, %v434
    %v436 = vand.u32 %v435, 4294901760
    %437 = vmatpush1.msra.mxu0 %v436
    %438 = vmatprep.subr.mxu0 0.0
    %v439 = vand.u32 %v28, 4294901760
    %v440 = vsub.f32 %v28, %v439
    %v441 = vand.u32 %v440, 4294901760
    %442 = vmatpush1.msra.mxu0 %v441
    %443 = vmatprep.subr.mxu0 0.0
    %v444 = vand.u32 %v43, 4294901760
    %v445 = vsub.f32 %v43, %v444
    %v446 = vand.u32 %v445, 4294901760
    %447 = vmatpush1.msra.mxu0 %v446
    %448 = vmatprep.subr.mxu0 0.0
    %449 = vmatpush1.msra.mxu0 0.0
    %450 = vmatprep.subr.mxu0 0.0
    %451 = vmatpush1.msra.mxu0 0.0
    %452 = vmatprep.subr.mxu0 0.0
    %453 = vmatpush1.msra.mxu0 0.0
    %454 = vmatprep.subr.mxu0 0.0
    %455 = vmatpush1.msra.mxu0 0.0
    %456 = vmatprep.subr.mxu0 0.0
    %457 = vmatpush1.msra.mxu0 0.0
    %458 = vmatprep.subr.mxu0 0.0
    %459 = vmatpush1.msra.mxu0 0.0
    %460 = vmatprep.subr.mxu0 0.0
    %461 = vmatpush1.msra.mxu0 0.0
    %462 = vmatprep.subr.mxu0 0.0
    %463 = vmatpush1.msra.mxu0 0.0
    %464 = vmatprep.subr.mxu0 0.0
    %465 = vmatpush1.msra.mxu0 0.0
    %466 = vmatprep.subr.mxu0 0.0
    %467 = vmatpush1.msra.mxu0 0.0
    %468 = vmatprep.subr.mxu0 0.0
    %469 = vmatpush1.msra.mxu0 0.0
    %470 = vmatprep.subr.mxu0 0.0
    %471 = vmatpush1.msra.mxu0 0.0
    %472 = vmatprep.subr.mxu0 0.0
    %473 = vmatpush1.msra.mxu0 0.0
    %474 = vmatprep.subr.mxu0 0.0
    %475 = vmatpush1.msra.mxu0 0.0
    %476 = vmatprep.subr.mxu0 0.0
    %477 = vmatpush1.msra.mxu0 0.0
    %478 = vmatprep.subr.mxu0 0.0
    %479 = vmatpush1.msra.mxu0 0.0
    %480 = vmatprep.subr.mxu0 0.0
    %481 = vmatpush1.msra.mxu0 0.0
    %482 = vmatprep.subr.mxu0 0.0
    %483 = vmatpush1.msra.mxu0 0.0
    %484 = vmatprep.subr.mxu0 0.0
    %485 = vmatpush1.msra.mxu0 0.0
    %486 = vmatprep.subr.mxu0 0.0
    %487 = vmatpush1.msra.mxu0 0.0
    %488 = vmatprep.subr.mxu0 0.0
    %489 = vmatpush1.msra.mxu0 0.0
    %490 = vmatprep.subr.mxu0 0.0
    %491 = vmatpush1.msra.mxu0 0.0
    %492 = vmatprep.subr.mxu0 0.0
    %493 = vmatpush1.msra.mxu0 0.0
    %494 = vmatprep.subr.mxu0 0.0
    %495 = vmatpush1.msra.mxu0 0.0
    %496 = vmatprep.mubr.f32.mxu0 0.0
    %v497 = vand.u32 %v39, 4294901760
    %498 = vmatmul.mubr.f32.gmra.mrb[0].mxu0 %v497
    %v499 = vpop.f32.mrb[0].mxu0
    %v500 = vadd.f32 %v405, %v499
    %v501 = vpop.f32.mrb[0].mxu0
    %502 = vdwg.mxu0
    %503 = vmatprep.subr.mxu0 0.0
    %v504 = vand.u32 %v22, 4294901760
    %505 = vmatpush1.msra.mxu0 %v504
    %506 = vmatprep.subr.mxu0 0.0
    %v507 = vand.u32 %v23, 4294901760
    %508 = vmatpush1.msra.mxu0 %v507
    %509 = vmatprep.subr.mxu0 0.0
    %v510 = vand.u32 %v24, 4294901760
    %511 = vmatpush1.msra.mxu0 %v510
    %512 = vmatprep.subr.mxu0 0.0
    %v513 = vand.u32 %v25, 4294901760
    %514 = vmatpush1.msra.mxu0 %v513
    %515 = vmatprep.subr.mxu0 0.0
    %v516 = vand.u32 %v26, 4294901760
    %517 = vmatpush1.msra.mxu0 %v516
    %518 = vmatprep.subr.mxu0 0.0
    %v519 = vand.u32 %v27, 4294901760
    %520 = vmatpush1.msra.mxu0 %v519
    %521 = vmatprep.subr.mxu0 0.0
    %v522 = vand.u32 %v28, 4294901760
    %523 = vmatpush1.msra.mxu0 %v522
    %524 = vmatprep.subr.mxu0 0.0
    %v525 = vand.u32 %v43, 4294901760
    %526 = vmatpush1.msra.mxu0 %v525
    %527 = vmatprep.subr.mxu0 0.0
    %528 = vmatpush1.msra.mxu0 0.0
    %529 = vmatprep.subr.mxu0 0.0
    %530 = vmatpush1.msra.mxu0 0.0
    %531 = vmatprep.subr.mxu0 0.0
    %532 = vmatpush1.msra.mxu0 0.0
    %533 = vmatprep.subr.mxu0 0.0
    %534 = vmatpush1.msra.mxu0 0.0
    %535 = vmatprep.subr.mxu0 0.0
    %536 = vmatpush1.msra.mxu0 0.0
    %537 = vmatprep.subr.mxu0 0.0
    %538 = vmatpush1.msra.mxu0 0.0
    %539 = vmatprep.subr.mxu0 0.0
    %540 = vmatpush1.msra.mxu0 0.0
    %541 = vmatprep.subr.mxu0 0.0
    %542 = vmatpush1.msra.mxu0 0.0
    %543 = vmatprep.subr.mxu0 0.0
    %544 = vmatpush1.msra.mxu0 0.0
    %545 = vmatprep.subr.mxu0 0.0
    %546 = vmatpush1.msra.mxu0 0.0
    %547 = vmatprep.subr.mxu0 0.0
    %548 = vmatpush1.msra.mxu0 0.0
    %549 = vmatprep.subr.mxu0 0.0
    %550 = vmatpush1.msra.mxu0 0.0
    %551 = vmatprep.subr.mxu0 0.0
    %552 = vmatpush1.msra.mxu0 0.0
    %553 = vmatprep.subr.mxu0 0.0
    %554 = vmatpush1.msra.mxu0 0.0
    %555 = vmatprep.subr.mxu0 0.0
    %556 = vmatpush1.msra.mxu0 0.0
    %557 = vmatprep.subr.mxu0 0.0
    %558 = vmatpush1.msra.mxu0 0.0
    %559 = vmatprep.subr.mxu0 0.0
    %560 = vmatpush1.msra.mxu0 0.0
    %561 = vmatprep.subr.mxu0 0.0
    %562 = vmatpush1.msra.mxu0 0.0
    %563 = vmatprep.subr.mxu0 0.0
    %564 = vmatpush1.msra.mxu0 0.0
    %565 = vmatprep.subr.mxu0 0.0
    %566 = vmatpush1.msra.mxu0 0.0
    %567 = vmatprep.subr.mxu0 0.0
    %568 = vmatpush1.msra.mxu0 0.0
    %569 = vmatprep.subr.mxu0 0.0
    %570 = vmatpush1.msra.mxu0 0.0
    %571 = vmatprep.subr.mxu0 0.0
    %572 = vmatpush1.msra.mxu0 0.0
    %573 = vmatprep.subr.mxu0 0.0
    %574 = vmatpush1.msra.mxu0 0.0
    %575 = vmatprep.mubr.f32.mxu0 0.0
    %v576 = vand.u32 %v39, 4294901760
    %577 = vmatmul.mubr.f32.gmra.mrb[0].mxu0 %v576
    %v578 = vpop.f32.mrb[0].mxu0
    %v579 = vadd.f32 %v500, %v578
    %v580 = vpop.f32.mrb[0].mxu0
    %581 = vdwg.mxu0
    %v582 = vmax.f32 %v579, 0.0
    %v583 = vld [vmem:[%s3] sm:$0xff]
    %v584 = vld [vmem:[%s3 + $0x8] sm:$0xff]
    %v585 = vld [vmem:[%s3 + $0x10] sm:$0xff]
    %v586 = vld [vmem:[%s3 + $0x18] sm:$0xff]
    %v587 = vld [vmem:[%s3 + $0x20] sm:$0xff]
    %v588 = vld [vmem:[%s3 + $0x28] sm:$0xff]
    %v589 = vld [vmem:[%s3 + $0x30] sm:$0xff]
    %v590 = vld [vmem:[%s3 + $0x38] sm:$0xff]
    %v591 = vld [vmem:[%s3 + $0x40] sm:$0xff]
    %v592 = vld [vmem:[%s3 + $0x48] sm:$0xff]
    %v593 = vld [vmem:[%s3 + $0x50] sm:$0xff]
    %v594 = vld [vmem:[%s3 + $0x58] sm:$0xff]
    %v595 = vld [vmem:[%s3 + $0x60] sm:$0xff]
    %v596 = vld [vmem:[%s3 + $0x68] sm:$0xff]
    %v597 = vld [vmem:[%s3 + $0x70] sm:$0xff]
    %v598 = vld [vmem:[%s3 + $0x78] sm:$0xff]
    %v599 = vld [vmem:[%s4] sm:$0x1]
    %v601 = vlaneseq
    %v602 = vshrl.u32 %v601, 7
    %v603 = vsub.s32 0, %v602
    %v604 = vrot.slane %v599, %v603
    %606 = vmatprep.subr.mxu0 0.0
    %v607 = vand.u32 %v583, 4294901760
    %608 = vmatpush1.msra.mxu0 %v607
    %609 = vmatprep.subr.mxu0 0.0
    %v610 = vand.u32 %v584, 4294901760
    %611 = vmatpush1.msra.mxu0 %v610
    %612 = vmatprep.subr.mxu0 0.0
    %v613 = vand.u32 %v585, 4294901760
    %614 = vmatpush1.msra.mxu0 %v613
    %615 = vmatprep.subr.mxu0 0.0
    %v616 = vand.u32 %v586, 4294901760
    %617 = vmatpush1.msra.mxu0 %v616
    %618 = vmatprep.subr.mxu0 0.0
    %v619 = vand.u32 %v587, 4294901760
    %620 = vmatpush1.msra.mxu0 %v619
    %621 = vmatprep.subr.mxu0 0.0
    %v622 = vand.u32 %v588, 4294901760
    %623 = vmatpush1.msra.mxu0 %v622
    %624 = vmatprep.subr.mxu0 0.0
    %v625 = vand.u32 %v589, 4294901760
    %626 = vmatpush1.msra.mxu0 %v625
    %627 = vmatprep.subr.mxu0 0.0
    %v628 = vand.u32 %v590, 4294901760
    %629 = vmatpush1.msra.mxu0 %v628
    %630 = vmatprep.subr.mxu0 0.0
    %v631 = vand.u32 %v591, 4294901760
    %632 = vmatpush1.msra.mxu0 %v631
    %633 = vmatprep.subr.mxu0 0.0
    %v634 = vand.u32 %v592, 4294901760
    %635 = vmatpush1.msra.mxu0 %v634
    %636 = vmatprep.subr.mxu0 0.0
    %v637 = vand.u32 %v593, 4294901760
    %638 = vmatpush1.msra.mxu0 %v637
    %639 = vmatprep.subr.mxu0 0.0
    %v640 = vand.u32 %v594, 4294901760
    %641 = vmatpush1.msra.mxu0 %v640
    %642 = vmatprep.subr.mxu0 0.0
    %v643 = vand.u32 %v595, 4294901760
    %644 = vmatpush1.msra.mxu0 %v643
    %645 = vmatprep.subr.mxu0 0.0
    %v646 = vand.u32 %v596, 4294901760
    %647 = vmatpush1.msra.mxu0 %v646
    %648 = vmatprep.subr.mxu0 0.0
    %v649 = vand.u32 %v597, 4294901760
    %650 = vmatpush1.msra.mxu0 %v649
    %651 = vmatprep.subr.mxu0 0.0
    %v652 = vand.u32 %v598, 4294901760
    %653 = vmatpush1.msra.mxu0 %v652
    %654 = vmatprep.subr.mxu0 0.0
    %655 = vmatpush1.msra.mxu0 0.0
    %656 = vmatprep.subr.mxu0 0.0
    %657 = vmatpush1.msra.mxu0 0.0
    %658 = vmatprep.subr.mxu0 0.0
    %659 = vmatpush1.msra.mxu0 0.0
    %660 = vmatprep.subr.mxu0 0.0
    %661 = vmatpush1.msra.mxu0 0.0
    %662 = vmatprep.subr.mxu0 0.0
    %663 = vmatpush1.msra.mxu0 0.0
    %664 = vmatprep.subr.mxu0 0.0
    %665 = vmatpush1.msra.mxu0 0.0
    %666 = vmatprep.subr.mxu0 0.0
    %667 = vmatpush1.msra.mxu0 0.0
    %668 = vmatprep.subr.mxu0 0.0
    %669 = vmatpush1.msra.mxu0 0.0
    %670 = vmatprep.subr.mxu0 0.0
    %671 = vmatpush1.msra.mxu0 0.0
    %672 = vmatprep.subr.mxu0 0.0
    %673 = vmatpush1.msra.mxu0 0.0
    %674 = vmatprep.subr.mxu0 0.0
    %675 = vmatpush1.msra.mxu0 0.0
    %676 = vmatprep.subr.mxu0 0.0
    %677 = vmatpush1.msra.mxu0 0.0
    %678 = vmatprep.subr.mxu0 0.0
    %679 = vmatpush1.msra.mxu0 0.0
    %680 = vmatprep.subr.mxu0 0.0
    %681 = vmatpush1.msra.mxu0 0.0
    %682 = vmatprep.subr.mxu0 0.0
    %683 = vmatpush1.msra.mxu0 0.0
    %684 = vmatprep.subr.mxu0 0.0
    %685 = vmatpush1.msra.mxu0 0.0
    %686 = vmatprep.mubr.f32.mxu0 0.0
    %v687 = vand.u32 %v582, 4294901760
    %v688 = vsub.f32 %v582, %v687
    %v689 = vand.u32 %v688, 4294901760
    %v690 = vsub.f32 %v688, %v689
    %v691 = vand.u32 %v690, 4294901760
    %692 = vmatmul.mubr.f32.gmra.mrb[0].mxu0 %v691
    %v693 = vpop.f32.mrb[0].mxu0
    %v694 = vadd.f32 %v604, %v693
    %v695 = vpop.f32.mrb[0].mxu0
    %696 = vdwg.mxu0
    %697 = vmatprep.subr.mxu0 0.0
    %v698 = vand.u32 %v583, 4294901760
    %v699 = vsub.f32 %v583, %v698
    %v700 = vand.u32 %v699, 4294901760
    %v701 = vsub.f32 %v699, %v700
    %v702 = vand.u32 %v701, 4294901760
    %703 = vmatpush1.msra.mxu0 %v702
    %704 = vmatprep.subr.mxu0 0.0
    %v705 = vand.u32 %v584, 4294901760
    %v706 = vsub.f32 %v584, %v705
    %v707 = vand.u32 %v706, 4294901760
    %v708 = vsub.f32 %v706, %v707
    %v709 = vand.u32 %v708, 4294901760
    %710 = vmatpush1.msra.mxu0 %v709
    %711 = vmatprep.subr.mxu0 0.0
    %v712 = vand.u32 %v585, 4294901760
    %v713 = vsub.f32 %v585, %v712
    %v714 = vand.u32 %v713, 4294901760
    %v715 = vsub.f32 %v713, %v714
    %v716 = vand.u32 %v715, 4294901760
    %717 = vmatpush1.msra.mxu0 %v716
    %718 = vmatprep.subr.mxu0 0.0
    %v719 = vand.u32 %v586, 4294901760
    %v720 = vsub.f32 %v586, %v719
    %v721 = vand.u32 %v720, 4294901760
    %v722 = vsub.f32 %v720, %v721
    %v723 = vand.u32 %v722, 4294901760
    %724 = vmatpush1.msra.mxu0 %v723
    %725 = vmatprep.subr.mxu0 0.0
    %v726 = vand.u32 %v587, 4294901760
    %v727 = vsub.f32 %v587, %v726
    %v728 = vand.u32 %v727, 4294901760
    %v729 = vsub.f32 %v727, %v728
    %v730 = vand.u32 %v729, 4294901760
    %731 = vmatpush1.msra.mxu0 %v730
    %732 = vmatprep.subr.mxu0 0.0
    %v733 = vand.u32 %v588, 4294901760
    %v734 = vsub.f32 %v588, %v733
    %v735 = vand.u32 %v734, 4294901760
    %v736 = vsub.f32 %v734, %v735
    %v737 = vand.u32 %v736, 4294901760
    %738 = vmatpush1.msra.mxu0 %v737
    %739 = vmatprep.subr.mxu0 0.0
    %v740 = vand.u32 %v589, 4294901760
    %v741 = vsub.f32 %v589, %v740
    %v742 = vand.u32 %v741, 4294901760
    %v743 = vsub.f32 %v741, %v742
    %v744 = vand.u32 %v743, 4294901760
    %745 = vmatpush1.msra.mxu0 %v744
    %746 = vmatprep.subr.mxu0 0.0
    %v747 = vand.u32 %v590, 4294901760
    %v748 = vsub.f32 %v590, %v747
    %v749 = vand.u32 %v748, 4294901760
    %v750 = vsub.f32 %v748, %v749
    %v751 = vand.u32 %v750, 4294901760
    %752 = vmatpush1.msra.mxu0 %v751
    %753 = vmatprep.subr.mxu0 0.0
    %v754 = vand.u32 %v591, 4294901760
    %v755 = vsub.f32 %v591, %v754
    %v756 = vand.u32 %v755, 4294901760
    %v757 = vsub.f32 %v755, %v756
    %v758 = vand.u32 %v757, 4294901760
    %759 = vmatpush1.msra.mxu0 %v758
    %760 = vmatprep.subr.mxu0 0.0
    %v761 = vand.u32 %v592, 4294901760
    %v762 = vsub.f32 %v592, %v761
    %v763 = vand.u32 %v762, 4294901760
    %v764 = vsub.f32 %v762, %v763
    %v765 = vand.u32 %v764, 4294901760
    %766 = vmatpush1.msra.mxu0 %v765
    %767 = vmatprep.subr.mxu0 0.0
    %v768 = vand.u32 %v593, 4294901760
    %v769 = vsub.f32 %v593, %v768
    %v770 = vand.u32 %v769, 4294901760
    %v771 = vsub.f32 %v769, %v770
    %v772 = vand.u32 %v771, 4294901760
    %773 = vmatpush1.msra.mxu0 %v772
    %774 = vmatprep.subr.mxu0 0.0
    %v775 = vand.u32 %v594, 4294901760
    %v776 = vsub.f32 %v594, %v775
    %v777 = vand.u32 %v776, 4294901760
    %v778 = vsub.f32 %v776, %v777
    %v779 = vand.u32 %v778, 4294901760
    %780 = vmatpush1.msra.mxu0 %v779
    %781 = vmatprep.subr.mxu0 0.0
    %v782 = vand.u32 %v595, 4294901760
    %v783 = vsub.f32 %v595, %v782
    %v784 = vand.u32 %v783, 4294901760
    %v785 = vsub.f32 %v783, %v784
    %v786 = vand.u32 %v785, 4294901760
    %787 = vmatpush1.msra.mxu0 %v786
    %788 = vmatprep.subr.mxu0 0.0
    %v789 = vand.u32 %v596, 4294901760
    %v790 = vsub.f32 %v596, %v789
    %v791 = vand.u32 %v790, 4294901760
    %v792 = vsub.f32 %v790, %v791
    %v793 = vand.u32 %v792, 4294901760
    %794 = vmatpush1.msra.mxu0 %v793
    %795 = vmatprep.subr.mxu0 0.0
    %v796 = vand.u32 %v597, 4294901760
    %v797 = vsub.f32 %v597, %v796
    %v798 = vand.u32 %v797, 4294901760
    %v799 = vsub.f32 %v797, %v798
    %v800 = vand.u32 %v799, 4294901760
    %801 = vmatpush1.msra.mxu0 %v800
    %802 = vmatprep.subr.mxu0 0.0
    %v803 = vand.u32 %v598, 4294901760
    %v804 = vsub.f32 %v598, %v803
    %v805 = vand.u32 %v804, 4294901760
    %v806 = vsub.f32 %v804, %v805
    %v807 = vand.u32 %v806, 4294901760
    %808 = vmatpush1.msra.mxu0 %v807
    %809 = vmatprep.subr.mxu0 0.0
    %810 = vmatpush1.msra.mxu0 0.0
    %811 = vmatprep.subr.mxu0 0.0
    %812 = vmatpush1.msra.mxu0 0.0
    %813 = vmatprep.subr.mxu0 0.0
    %814 = vmatpush1.msra.mxu0 0.0
    %815 = vmatprep.subr.mxu0 0.0
    %816 = vmatpush1.msra.mxu0 0.0
    %817 = vmatprep.subr.mxu0 0.0
    %818 = vmatpush1.msra.mxu0 0.0
    %819 = vmatprep.subr.mxu0 0.0
    %820 = vmatpush1.msra.mxu0 0.0
    %821 = vmatprep.subr.mxu0 0.0
    %822 = vmatpush1.msra.mxu0 0.0
    %823 = vmatprep.subr.mxu0 0.0
    %824 = vmatpush1.msra.mxu0 0.0
    %825 = vmatprep.subr.mxu0 0.0
    %826 = vmatpush1.msra.mxu0 0.0
    %827 = vmatprep.subr.mxu0 0.0
    %828 = vmatpush1.msra.mxu0 0.0
    %829 = vmatprep.subr.mxu0 0.0
    %830 = vmatpush1.msra.mxu0 0.0
    %831 = vmatprep.subr.mxu0 0.0
    %832 = vmatpush1.msra.mxu0 0.0
    %833 = vmatprep.subr.mxu0 0.0
    %834 = vmatpush1.msra.mxu0 0.0
    %835 = vmatprep.subr.mxu0 0.0
    %836 = vmatpush1.msra.mxu0 0.0
    %837 = vmatprep.subr.mxu0 0.0
    %838 = vmatpush1.msra.mxu0 0.0
    %839 = vmatprep.subr.mxu0 0.0
    %840 = vmatpush1.msra.mxu0 0.0
    %841 = vmatprep.mubr.f32.mxu0 0.0
    %v842 = vand.u32 %v582, 4294901760
    %843 = vmatmul.mubr.f32.gmra.mrb[0].mxu0 %v842
    %v844 = vpop.f32.mrb[0].mxu0
    %v845 = vadd.f32 %v694, %v844
    %v846 = vpop.f32.mrb[0].mxu0
    %847 = vdwg.mxu0
    %848 = vmatprep.subr.mxu0 0.0
    %v849 = vand.u32 %v583, 4294901760
    %v850 = vsub.f32 %v583, %v849
    %851 = vmatpush1.msra.mxu0 %v850
    %852 = vmatprep.subr.mxu0 0.0
    %v853 = vand.u32 %v584, 4294901760
    %v854 = vsub.f32 %v584, %v853
    %855 = vmatpush1.msra.mxu0 %v854
    %856 = vmatprep.subr.mxu0 0.0
    %v857 = vand.u32 %v585, 4294901760
    %v858 = vsub.f32 %v585, %v857
    %859 = vmatpush1.msra.mxu0 %v858
    %860 = vmatprep.subr.mxu0 0.0
    %v861 = vand.u32 %v586, 4294901760
    %v862 = vsub.f32 %v586, %v861
    %863 = vmatpush1.msra.mxu0 %v862
    %864 = vmatprep.subr.mxu0 0.0
    %v865 = vand.u32 %v587, 4294901760
    %v866 = vsub.f32 %v587, %v865
    %867 = vmatpush1.msra.mxu0 %v866
    %868 = vmatprep.subr.mxu0 0.0
    %v869 = vand.u32 %v588, 4294901760
    %v870 = vsub.f32 %v588, %v869
    %871 = vmatpush1.msra.mxu0 %v870
    %872 = vmatprep.subr.mxu0 0.0
    %v873 = vand.u32 %v589, 4294901760
    %v874 = vsub.f32 %v589, %v873
    %875 = vmatpush1.msra.mxu0 %v874
    %876 = vmatprep.subr.mxu0 0.0
    %v877 = vand.u32 %v590, 4294901760
    %v878 = vsub.f32 %v590, %v877
    %879 = vmatpush1.msra.mxu0 %v878
    %880 = vmatprep.subr.mxu0 0.0
    %v881 = vand.u32 %v591, 4294901760
    %v882 = vsub.f32 %v591, %v881
    %883 = vmatpush1.msra.mxu0 %v882
    %884 = vmatprep.subr.mxu0 0.0
    %v885 = vand.u32 %v592, 4294901760
    %v886 = vsub.f32 %v592, %v885
    %887 = vmatpush1.msra.mxu0 %v886
    %888 = vmatprep.subr.mxu0 0.0
    %v889 = vand.u32 %v593, 4294901760
    %v890 = vsub.f32 %v593, %v889
    %891 = vmatpush1.msra.mxu0 %v890
    %892 = vmatprep.subr.mxu0 0.0
    %v893 = vand.u32 %v594, 4294901760
    %v894 = vsub.f32 %v594, %v893
    %895 = vmatpush1.msra.mxu0 %v894
    %896 = vmatprep.subr.mxu0 0.0
    %v897 = vand.u32 %v595, 4294901760
    %v898 = vsub.f32 %v595, %v897
    %899 = vmatpush1.msra.mxu0 %v898
    %900 = vmatprep.subr.mxu0 0.0
    %v901 = vand.u32 %v596, 4294901760
    %v902 = vsub.f32 %v596, %v901
    %903 = vmatpush1.msra.mxu0 %v902
    %904 = vmatprep.subr.mxu0 0.0
    %v905 = vand.u32 %v597, 4294901760
    %v906 = vsub.f32 %v597, %v905
    %907 = vmatpush1.msra.mxu0 %v906
    %908 = vmatprep.subr.mxu0 0.0
    %v909 = vand.u32 %v598, 4294901760
    %v910 = vsub.f32 %v598, %v909
    %911 = vmatpush1.msra.mxu0 %v910
    %912 = vmatprep.subr.mxu0 0.0
    %913 = vmatpush1.msra.mxu0 0.0
    %914 = vmatprep.subr.mxu0 0.0
    %915 = vmatpush1.msra.mxu0 0.0
    %916 = vmatprep.subr.mxu0 0.0
    %917 = vmatpush1.msra.mxu0 0.0
    %918 = vmatprep.subr.mxu0 0.0
    %919 = vmatpush1.msra.mxu0 0.0
    %920 = vmatprep.subr.mxu0 0.0
    %921 = vmatpush1.msra.mxu0 0.0
    %922 = vmatprep.subr.mxu0 0.0
    %923 = vmatpush1.msra.mxu0 0.0
    %924 = vmatprep.subr.mxu0 0.0
    %925 = vmatpush1.msra.mxu0 0.0
    %926 = vmatprep.subr.mxu0 0.0
    %927 = vmatpush1.msra.mxu0 0.0
    %928 = vmatprep.subr.mxu0 0.0
    %929 = vmatpush1.msra.mxu0 0.0
    %930 = vmatprep.subr.mxu0 0.0
    %931 = vmatpush1.msra.mxu0 0.0
    %932 = vmatprep.subr.mxu0 0.0
    %933 = vmatpush1.msra.mxu0 0.0
    %934 = vmatprep.subr.mxu0 0.0
    %935 = vmatpush1.msra.mxu0 0.0
    %936 = vmatprep.subr.mxu0 0.0
    %937 = vmatpush1.msra.mxu0 0.0
    %938 = vmatprep.subr.mxu0 0.0
    %939 = vmatpush1.msra.mxu0 0.0
    %940 = vmatprep.subr.mxu0 0.0
    %941 = vmatpush1.msra.mxu0 0.0
    %942 = vmatprep.subr.mxu0 0.0
    %943 = vmatpush1.msra.mxu0 0.0
    %944 = vmatprep.mubr.f32.mxu0 0.0
    %v945 = vand.u32 %v582, 4294901760
    %v946 = vsub.f32 %v582, %v945
    %947 = vmatmul.mubr.f32.gmra.mrb[0].mxu0 %v946
    %v948 = vpop.f32.mrb[0].mxu0
    %v949 = vadd.f32 %v845, %v948
    %v950 = vpop.f32.mrb[0].mxu0
    %951 = vdwg.mxu0
    %952 = vmatprep.subr.mxu0 0.0
    %v953 = vand.u32 %v583, 4294901760
    %954 = vmatpush1.msra.mxu0 %v953
    %955 = vmatprep.subr.mxu0 0.0
    %v956 = vand.u32 %v584, 4294901760
    %957 = vmatpush1.msra.mxu0 %v956
    %958 = vmatprep.subr.mxu0 0.0
    %v959 = vand.u32 %v585, 4294901760
    %960 = vmatpush1.msra.mxu0 %v959
    %961 = vmatprep.subr.mxu0 0.0
    %v962 = vand.u32 %v586, 4294901760
    %963 = vmatpush1.msra.mxu0 %v962
    %964 = vmatprep.subr.mxu0 0.0
    %v965 = vand.u32 %v587, 4294901760
    %966 = vmatpush1.msra.mxu0 %v965
    %967 = vmatprep.subr.mxu0 0.0
    %v968 = vand.u32 %v588, 4294901760
    %969 = vmatpush1.msra.mxu0 %v968
    %970 = vmatprep.subr.mxu0 0.0
    %v971 = vand.u32 %v589, 4294901760
    %972 = vmatpush1.msra.mxu0 %v971
    %973 = vmatprep.subr.mxu0 0.0
    %v974 = vand.u32 %v590, 4294901760
    %975 = vmatpush1.msra.mxu0 %v974
    %976 = vmatprep.subr.mxu0 0.0
    %v977 = vand.u32 %v591, 4294901760
    %978 = vmatpush1.msra.mxu0 %v977
    %979 = vmatprep.subr.mxu0 0.0
    %v980 = vand.u32 %v592, 4294901760
    %981 = vmatpush1.msra.mxu0 %v980
    %982 = vmatprep.subr.mxu0 0.0
    %v983 = vand.u32 %v593, 4294901760
    %984 = vmatpush1.msra.mxu0 %v983
    %985 = vmatprep.subr.mxu0 0.0
    %v986 = vand.u32 %v594, 4294901760
    %987 = vmatpush1.msra.mxu0 %v986
    %988 = vmatprep.subr.mxu0 0.0
    %v989 = vand.u32 %v595, 4294901760
    %990 = vmatpush1.msra.mxu0 %v989
    %991 = vmatprep.subr.mxu0 0.0
    %v992 = vand.u32 %v596, 4294901760
    %993 = vmatpush1.msra.mxu0 %v992
    %994 = vmatprep.subr.mxu0 0.0
    %v995 = vand.u32 %v597, 4294901760
    %996 = vmatpush1.msra.mxu0 %v995
    %997 = vmatprep.subr.mxu0 0.0
    %v998 = vand.u32 %v598, 4294901760
    %999 = vmatpush1.msra.mxu0 %v998
    %1000 = vmatprep.subr.mxu0 0.0
    %1001 = vmatpush1.msra.mxu0 0.0
    %1002 = vmatprep.subr.mxu0 0.0
    %1003 = vmatpush1.msra.mxu0 0.0
    %1004 = vmatprep.subr.mxu0 0.0
    %1005 = vmatpush1.msra.mxu0 0.0
    %1006 = vmatprep.subr.mxu0 0.0
    %1007 = vmatpush1.msra.mxu0 0.0
    %1008 = vmatprep.subr.mxu0 0.0
    %1009 = vmatpush1.msra.mxu0 0.0
    %1010 = vmatprep.subr.mxu0 0.0
    %1011 = vmatpush1.msra.mxu0 0.0
    %1012 = vmatprep.subr.mxu0 0.0
    %1013 = vmatpush1.msra.mxu0 0.0
    %1014 = vmatprep.subr.mxu0 0.0
    %1015 = vmatpush1.msra.mxu0 0.0
    %1016 = vmatprep.subr.mxu0 0.0
    %1017 = vmatpush1.msra.mxu0 0.0
    %1018 = vmatprep.subr.mxu0 0.0
    %1019 = vmatpush1.msra.mxu0 0.0
    %1020 = vmatprep.subr.mxu0 0.0
    %1021 = vmatpush1.msra.mxu0 0.0
    %1022 = vmatprep.subr.mxu0 0.0
    %1023 = vmatpush1.msra.mxu0 0.0
    %1024 = vmatprep.subr.mxu0 0.0
    %1025 = vmatpush1.msra.mxu0 0.0
    %1026 = vmatprep.subr.mxu0 0.0
    %1027 = vmatpush1.msra.mxu0 0.0
    %1028 = vmatprep.subr.mxu0 0.0
    %1029 = vmatpush1.msra.mxu0 0.0
    %1030 = vmatprep.subr.mxu0 0.0
    %1031 = vmatpush1.msra.mxu0 0.0
    %1032 = vmatprep.mubr.f32.mxu0 0.0
    %v1033 = vand.u32 %v582, 4294901760
    %v1034 = vsub.f32 %v582, %v1033
    %v1035 = vand.u32 %v1034, 4294901760
    %1036 = vmatmul.mubr.f32.gmra.mrb[0].mxu0 %v1035
    %v1037 = vpop.f32.mrb[0].mxu0
    %v1038 = vadd.f32 %v949, %v1037
    %v1039 = vpop.f32.mrb[0].mxu0
    %1040 = vdwg.mxu0
    %1041 = vmatprep.subr.mxu0 0.0
    %v1042 = vand.u32 %v583, 4294901760
    %v1043 = vsub.f32 %v583, %v1042
    %v1044 = vand.u32 %v1043, 4294901760
    %1045 = vmatpush1.msra.mxu0 %v1044
    %1046 = vmatprep.subr.mxu0 0.0
    %v1047 = vand.u32 %v584, 4294901760
    %v1048 = vsub.f32 %v584, %v1047
    %v1049 = vand.u32 %v1048, 4294901760
    %1050 = vmatpush1.msra.mxu0 %v1049
    %1051 = vmatprep.subr.mxu0 0.0
    %v1052 = vand.u32 %v585, 4294901760
    %v1053 = vsub.f32 %v585, %v1052
    %v1054 = vand.u32 %v1053, 4294901760
    %1055 = vmatpush1.msra.mxu0 %v1054
    %1056 = vmatprep.subr.mxu0 0.0
    %v1057 = vand.u32 %v586, 4294901760
    %v1058 = vsub.f32 %v586, %v1057
    %v1059 = vand.u32 %v1058, 4294901760
    %1060 = vmatpush1.msra.mxu0 %v1059
    %1061 = vmatprep.subr.mxu0 0.0
    %v1062 = vand.u32 %v587, 4294901760
    %v1063 = vsub.f32 %v587, %v1062
    %v1064 = vand.u32 %v1063, 4294901760
    %1065 = vmatpush1.msra.mxu0 %v1064
    %1066 = vmatprep.subr.mxu0 0.0
    %v1067 = vand.u32 %v588, 4294901760
    %v1068 = vsub.f32 %v588, %v1067
    %v1069 = vand.u32 %v1068, 4294901760
    %1070 = vmatpush1.msra.mxu0 %v1069
    %1071 = vmatprep.subr.mxu0 0.0
    %v1072 = vand.u32 %v589, 4294901760
    %v1073 = vsub.f32 %v589, %v1072
    %v1074 = vand.u32 %v1073, 4294901760
    %1075 = vmatpush1.msra.mxu0 %v1074
    %1076 = vmatprep.subr.mxu0 0.0
    %v1077 = vand.u32 %v590, 4294901760
    %v1078 = vsub.f32 %v590, %v1077
    %v1079 = vand.u32 %v1078, 4294901760
    %1080 = vmatpush1.msra.mxu0 %v1079
    %1081 = vmatprep.subr.mxu0 0.0
    %v1082 = vand.u32 %v591, 4294901760
    %v1083 = vsub.f32 %v591, %v1082
    %v1084 = vand.u32 %v1083, 4294901760
    %1085 = vmatpush1.msra.mxu0 %v1084
    %1086 = vmatprep.subr.mxu0 0.0
    %v1087 = vand.u32 %v592, 4294901760
    %v1088 = vsub.f32 %v592, %v1087
    %v1089 = vand.u32 %v1088, 4294901760
    %1090 = vmatpush1.msra.mxu0 %v1089
    %1091 = vmatprep.subr.mxu0 0.0
    %v1092 = vand.u32 %v593, 4294901760
    %v1093 = vsub.f32 %v593, %v1092
    %v1094 = vand.u32 %v1093, 4294901760
    %1095 = vmatpush1.msra.mxu0 %v1094
    %1096 = vmatprep.subr.mxu0 0.0
    %v1097 = vand.u32 %v594, 4294901760
    %v1098 = vsub.f32 %v594, %v1097
    %v1099 = vand.u32 %v1098, 4294901760
    %1100 = vmatpush1.msra.mxu0 %v1099
    %1101 = vmatprep.subr.mxu0 0.0
    %v1102 = vand.u32 %v595, 4294901760
    %v1103 = vsub.f32 %v595, %v1102
    %v1104 = vand.u32 %v1103, 4294901760
    %1105 = vmatpush1.msra.mxu0 %v1104
    %1106 = vmatprep.subr.mxu0 0.0
    %v1107 = vand.u32 %v596, 4294901760
    %v1108 = vsub.f32 %v596, %v1107
    %v1109 = vand.u32 %v1108, 4294901760
    %1110 = vmatpush1.msra.mxu0 %v1109
    %1111 = vmatprep.subr.mxu0 0.0
    %v1112 = vand.u32 %v597, 4294901760
    %v1113 = vsub.f32 %v597, %v1112
    %v1114 = vand.u32 %v1113, 4294901760
    %1115 = vmatpush1.msra.mxu0 %v1114
    %1116 = vmatprep.subr.mxu0 0.0
    %v1117 = vand.u32 %v598, 4294901760
    %v1118 = vsub.f32 %v598, %v1117
    %v1119 = vand.u32 %v1118, 4294901760
    %1120 = vmatpush1.msra.mxu0 %v1119
    %1121 = vmatprep.subr.mxu0 0.0
    %1122 = vmatpush1.msra.mxu0 0.0
    %1123 = vmatprep.subr.mxu0 0.0
    %1124 = vmatpush1.msra.mxu0 0.0
    %1125 = vmatprep.subr.mxu0 0.0
    %1126 = vmatpush1.msra.mxu0 0.0
    %1127 = vmatprep.subr.mxu0 0.0
    %1128 = vmatpush1.msra.mxu0 0.0
    %1129 = vmatprep.subr.mxu0 0.0
    %1130 = vmatpush1.msra.mxu0 0.0
    %1131 = vmatprep.subr.mxu0 0.0
    %1132 = vmatpush1.msra.mxu0 0.0
    %1133 = vmatprep.subr.mxu0 0.0
    %1134 = vmatpush1.msra.mxu0 0.0
    %1135 = vmatprep.subr.mxu0 0.0
    %1136 = vmatpush1.msra.mxu0 0.0
    %1137 = vmatprep.subr.mxu0 0.0
    %1138 = vmatpush1.msra.mxu0 0.0
    %1139 = vmatprep.subr.mxu0 0.0
    %1140 = vmatpush1.msra.mxu0 0.0
    %1141 = vmatprep.subr.mxu0 0.0
    %1142 = vmatpush1.msra.mxu0 0.0
    %1143 = vmatprep.subr.mxu0 0.0
    %1144 = vmatpush1.msra.mxu0 0.0
    %1145 = vmatprep.subr.mxu0 0.0
    %1146 = vmatpush1.msra.mxu0 0.0
    %1147 = vmatprep.subr.mxu0 0.0
    %1148 = vmatpush1.msra.mxu0 0.0
    %1149 = vmatprep.subr.mxu0 0.0
    %1150 = vmatpush1.msra.mxu0 0.0
    %1151 = vmatprep.subr.mxu0 0.0
    %1152 = vmatpush1.msra.mxu0 0.0
    %1153 = vmatprep.mubr.f32.mxu0 0.0
    %v1154 = vand.u32 %v582, 4294901760
    %1155 = vmatmul.mubr.f32.gmra.mrb[0].mxu0 %v1154
    %v1156 = vpop.f32.mrb[0].mxu0
    %v1157 = vadd.f32 %v1038, %v1156
    %v1158 = vpop.f32.mrb[0].mxu0
    %1159 = vdwg.mxu0
    %1160 = vmatprep.subr.mxu0 0.0
    %v1161 = vand.u32 %v583, 4294901760
    %1162 = vmatpush1.msra.mxu0 %v1161
    %1163 = vmatprep.subr.mxu0 0.0
    %v1164 = vand.u32 %v584, 4294901760
    %1165 = vmatpush1.msra.mxu0 %v1164
    %1166 = vmatprep.subr.mxu0 0.0
    %v1167 = vand.u32 %v585, 4294901760
    %1168 = vmatpush1.msra.mxu0 %v1167
    %1169 = vmatprep.subr.mxu0 0.0
    %v1170 = vand.u32 %v586, 4294901760
    %1171 = vmatpush1.msra.mxu0 %v1170
    %1172 = vmatprep.subr.mxu0 0.0
    %v1173 = vand.u32 %v587, 4294901760
    %1174 = vmatpush1.msra.mxu0 %v1173
    %1175 = vmatprep.subr.mxu0 0.0
    %v1176 = vand.u32 %v588, 4294901760
    %1177 = vmatpush1.msra.mxu0 %v1176
    %1178 = vmatprep.subr.mxu0 0.0
    %v1179 = vand.u32 %v589, 4294901760
    %1180 = vmatpush1.msra.mxu0 %v1179
    %1181 = vmatprep.subr.mxu0 0.0
    %v1182 = vand.u32 %v590, 4294901760
    %1183 = vmatpush1.msra.mxu0 %v1182
    %1184 = vmatprep.subr.mxu0 0.0
    %v1185 = vand.u32 %v591, 4294901760
    %1186 = vmatpush1.msra.mxu0 %v1185
    %1187 = vmatprep.subr.mxu0 0.0
    %v1188 = vand.u32 %v592, 4294901760
    %1189 = vmatpush1.msra.mxu0 %v1188
    %1190 = vmatprep.subr.mxu0 0.0
    %v1191 = vand.u32 %v593, 4294901760
    %1192 = vmatpush1.msra.mxu0 %v1191
    %1193 = vmatprep.subr.mxu0 0.0
    %v1194 = vand.u32 %v594, 4294901760
    %1195 = vmatpush1.msra.mxu0 %v1194
    %1196 = vmatprep.subr.mxu0 0.0
    %v1197 = vand.u32 %v595, 4294901760
    %1198 = vmatpush1.msra.mxu0 %v1197
    %1199 = vmatprep.subr.mxu0 0.0
    %v1200 = vand.u32 %v596, 4294901760
    %1201 = vmatpush1.msra.mxu0 %v1200
    %1202 = vmatprep.subr.mxu0 0.0
    %v1203 = vand.u32 %v597, 4294901760
    %1204 = vmatpush1.msra.mxu0 %v1203
    %1205 = vmatprep.subr.mxu0 0.0
    %v1206 = vand.u32 %v598, 4294901760
    %1207 = vmatpush1.msra.mxu0 %v1206
    %1208 = vmatprep.subr.mxu0 0.0
    %1209 = vmatpush1.msra.mxu0 0.0
    %1210 = vmatprep.subr.mxu0 0.0
    %1211 = vmatpush1.msra.mxu0 0.0
    %1212 = vmatprep.subr.mxu0 0.0
    %1213 = vmatpush1.msra.mxu0 0.0
    %1214 = vmatprep.subr.mxu0 0.0
    %1215 = vmatpush1.msra.mxu0 0.0
    %1216 = vmatprep.subr.mxu0 0.0
    %1217 = vmatpush1.msra.mxu0 0.0
    %1218 = vmatprep.subr.mxu0 0.0
    %1219 = vmatpush1.msra.mxu0 0.0
    %1220 = vmatprep.subr.mxu0 0.0
    %1221 = vmatpush1.msra.mxu0 0.0
    %1222 = vmatprep.subr.mxu0 0.0
    %1223 = vmatpush1.msra.mxu0 0.0
    %1224 = vmatprep.subr.mxu0 0.0
    %1225 = vmatpush1.msra.mxu0 0.0
    %1226 = vmatprep.subr.mxu0 0.0
    %1227 = vmatpush1.msra.mxu0 0.0
    %1228 = vmatprep.subr.mxu0 0.0
    %1229 = vmatpush1.msra.mxu0 0.0
    %1230 = vmatprep.subr.mxu0 0.0
    %1231 = vmatpush1.msra.mxu0 0.0
    %1232 = vmatprep.subr.mxu0 0.0
    %1233 = vmatpush1.msra.mxu0 0.0
    %1234 = vmatprep.subr.mxu0 0.0
    %1235 = vmatpush1.msra.mxu0 0.0
    %1236 = vmatprep.subr.mxu0 0.0
    %1237 = vmatpush1.msra.mxu0 0.0
    %1238 = vmatprep.subr.mxu0 0.0
    %1239 = vmatpush1.msra.mxu0 0.0
    %1240 = vmatprep.mubr.f32.mxu0 0.0
    %v1241 = vand.u32 %v582, 4294901760
    %1242 = vmatmul.mubr.f32.gmra.mrb[0].mxu0 %v1241
    %v1243 = vpop.f32.mrb[0].mxu0
    %v1244 = vadd.f32 %v1157, %v1243
    %v1245 = vpop.f32.mrb[0].mxu0
    %1246 = vdwg.mxu0
    %vm1247 = vcmask 248832
    %1248 = vst.msk [vmem:[#allocation2] sm:$0xf] %vm1247, %v1244
    // Predicated region
    $region22: #{tpu_custom_call.1} parent=1 // pred_check
      _
    $region23: #{tpu_custom_call.1} parent=1 // pred_check_branch
      %1250 = sbr.rel (0) target = $region25
    $region24: #{tpu_custom_call.1} parent=1 // pred_region
      %s1252 = ssub.s32 64, 64
      %1253 = vsyncadd [#allocation3], %s1252
      %s1255 = sshll.u32 [#allocation2], 4
      %s1256 = int_to_ptr.vmem [resolvable:$true] %s1255
      %1258 = dma.vmem_to_hbm [thread:$0]  %s1256, 64, %s5, [#allocation3]
    $region25: #{tpu_custom_call.1} parent=1 // pred_fallthru
      _
    // Predicated region
    $region26: #{tpu_custom_call.1} parent=1 // pred_check
      _
    $region27: #{tpu_custom_call.1} parent=1 // pred_check_branch
      %1260 = sbr.rel (0) target = $region29
    $region28: #{tpu_custom_call.1} parent=1 // pred_region
      %1261 = dma.done [#allocation3], 64
    $region29: #{tpu_custom_call.1} parent=1 // pred_fallthru
      _
    %1262 = vsyncpa [#allocation3], 1

</llo_original>
